<compile_context>
chip_gen: v7x
topology: tpu7x:2x2x1
jax: 0.10.0
libtpu: 0.0.40
codegen_flags: <defaults>
</compile_context>

<pallas_src>
import math

import jax
import jax.numpy as jnp
from jax.experimental import pallas as pl
from jax.experimental.pallas import tpu as pltpu


# --------------------------------------------------------------------------------------
# Math helpers
# --------------------------------------------------------------------------------------
def _gelu_tanh(x):
    # Exact GELU('tanh') approximation used by nn.GELU('tanh').
    c = math.sqrt(2.0 / math.pi)
    return 0.5 * x * (1.0 + jnp.tanh(c * (x + 0.044715 * x * x * x)))


def _round_up(v, m):
    return (v + m - 1) // m * m


def _sublane_multiple(dtype):
    # Native sublane packing: f32 -> 8, bf16 -> 16, int8/fp8 -> 32.
    return max(8, 32 // jnp.dtype(dtype).itemsize)


def _device_vmem_bytes():
    try:
        return int(pltpu.get_tpu_info().vmem_capacity_bytes)
    except Exception:
        # Conservative fallback: v7x per-TensorCore VMEM.
        return 64 << 20


def _vmem_estimate(tm, th, dim, hidden, x_dt, w_dt, tiled):
    """Rough VMEM footprint: double-buffered pipelined operands + temporaries."""
    xb = jnp.dtype(x_dt).itemsize
    wb = jnp.dtype(w_dt).itemsize
    est = 2 * tm * dim * xb                 # x row tile (double-buffered)
    est += 2 * tm * dim * xb                # output tile (double-buffered)
    est += 2 * (dim * th + th) * wb         # W1 tile + b1 tile
    est += 2 * (th * dim + dim) * wb        # W2 tile + b2
    est += tm * th * (4 + wb)               # f32 GELU intermediate + its cast copy
    if tiled:
        est += tm * dim * 4                 # f32 accumulator scratch
    return est


# --------------------------------------------------------------------------------------
# Kernels
# --------------------------------------------------------------------------------------
def mlp_kernel_single(x_ref, w1_ref, b1_ref, w2_ref, b2_ref, o_ref):
    """Resident-weights path: the whole hidden dim in one step, no accumulator."""
    h = jnp.dot(x_ref[...], w1_ref[...], preferred_element_type=jnp.float32)
    h = _gelu_tanh(h + b1_ref[...].astype(jnp.float32))
    y = jnp.dot(h.astype(w2_ref.dtype), w2_ref[...], preferred_element_type=jnp.float32)
    # dropout(p=0.0) in eval mode is the identity.
    o_ref[...] = (y + b2_ref[...].astype(jnp.float32)).astype(o_ref.dtype)


def mlp_kernel_tiled(x_ref, w1_ref, b1_ref, w2_ref, b2_ref, o_ref, acc_ref):
    """Hidden-tiled path: accumulate c_proj partials across hidden tiles in f32."""
    k = pl.program_id(1)

    # c_fc partial: (tm, dim) @ (dim, th), f32 accumulation on the MXU.
    h = jnp.dot(x_ref[...], w1_ref[...], preferred_element_type=jnp.float32)
    h = _gelu_tanh(h + b1_ref[...].astype(jnp.float32))

    # c_proj partial: (tm, th) @ (th, dim).
    partial = jnp.dot(h.astype(w2_ref.dtype), w2_ref[...],
                      preferred_element_type=jnp.float32)

    @pl.when(k == 0)
    def _():
        # Direct write: no zero-fill + read-modify-write on the first hidden tile.
        acc_ref[...] = partial

    @pl.when(k > 0)
    def _():
        acc_ref[...] += partial

    @pl.when(k == pl.num_programs(1) - 1)
    def _():
        # dropout(p=0.0) in eval mode is the identity.
        o_ref[...] = (acc_ref[...] + b2_ref[...].astype(jnp.float32)).astype(o_ref.dtype)


# --------------------------------------------------------------------------------------
# Wrapper
# --------------------------------------------------------------------------------------
def mlp_forward(x, w1, b1, w2, b2, *, tm=None, th=None, vmem_headroom=12 << 20):
    """x: (N, dim); w1: (dim, hidden); b1: (hidden,); w2: (hidden, dim); b2: (dim,)."""
    N, dim = x.shape
    hidden = w1.shape[1]
    assert w1.shape == (dim, hidden)
    assert w2.shape == (hidden, dim)
    assert b1.shape == (hidden,) and b2.shape == (dim,)

    x_dt, w_dt = x.dtype, w1.dtype
    sub = _sublane_multiple(x_dt)
    n_aligned = _round_up(N, sub)

    vmem_cap = _device_vmem_bytes()
    budget = max(vmem_cap - vmem_headroom, 16 << 20)

    # ---- row-tile candidates (generation-aware default, sublane aligned) -------------
    if tm is not None:
        tm_cands = [min(_round_up(tm, sub), n_aligned)]
    else:
        base = 768 if vmem_cap > (96 << 20) else 512
        tm_cands = []
        for t in (base, 512, 384, 256, 128, 64, 32, 16, 8):
            t = min(_round_up(t, sub), n_aligned)
            if t not in tm_cands:
                tm_cands.append(t)

    # ---- hidden-tile candidates --------------------------------------------------------
    force_tiled = (th is not None and th < hidden
                   and hidden % th == 0 and th % 128 == 0)

    def _th_cands():
        if force_tiled:
            return [th]
        return [t for t in (2048, 1024, 512, 256, 128)
                if t < hidden and hidden % t == 0]

    tm_eff = None
    th_eff = None

    if not force_tiled:
        # Prefer VMEM-resident weights (single hidden step, weights DMA'd once total).
        for t in tm_cands:
            if _vmem_estimate(t, hidden, dim, hidden, x_dt, w_dt, tiled=False) <= budget:
                tm_eff, th_eff = t, hidden
                break
    if tm_eff is None:
        # Hidden-tiled path: largest (tm, th) pair that fits the budget.
        for t in tm_cands:
            for hth in _th_cands():
                if _vmem_estimate(t, hth, dim, hidden, x_dt, w_dt, tiled=True) <= budget:
                    tm_eff, th_eff = t, hth
                    break
            if tm_eff is not None:
                break
    if tm_eff is None:
        # Fallback for extreme shapes: smallest row tile, full hidden.
        tm_eff, th_eff = tm_cands[-1], hidden

    # Megacore-friendliness: keep >= 2 row tiles when possible so v7x's 2 TCs both work.
    if tm is None and n_aligned // tm_eff < 2 and n_aligned >= 2 * sub:
        tm_eff = _round_up((n_aligned + 1) // 2, sub)

    # ---- pad rows so the grid divides evenly ------------------------------------------
    n_pad = _round_up(N, tm_eff)
    if n_pad != N:
        x = jnp.pad(x, ((0, n_pad - N), (0, 0)))

    b1_2d = b1.reshape(1, hidden)
    b2_2d = b2.reshape(1, dim)

    tiled = th_eff < hidden
    if tiled:
        grid = (n_pad // tm_eff, hidden // th_eff)
        in_specs = [
            pl.BlockSpec((tm_eff, dim), lambda i, k: (i, 0)),     # x row tile
            pl.BlockSpec((dim, th_eff), lambda i, k: (0, k)),     # W1 hidden-column tile
            pl.BlockSpec((1, th_eff), lambda i, k: (0, k)),       # b1 tile
            pl.BlockSpec((th_eff, dim), lambda i, k: (k, 0)),     # W2 hidden-row tile
            pl.BlockSpec((1, dim), lambda i, k: (0, 0)),          # b2 (grid-invariant)
        ]
        out_specs = pl.BlockSpec((tm_eff, dim), lambda i, k: (i, 0))
        scratch = [pltpu.VMEM((tm_eff, dim), jnp.float32)]
        kernel = mlp_kernel_tiled
        dims_sem = ("parallel", "arbitrary")
    else:
        grid = (n_pad // tm_eff,)
        in_specs = [
            pl.BlockSpec((tm_eff, dim), lambda i: (i, 0)),        # x row tile
            pl.BlockSpec((dim, hidden), lambda i: (0, 0)),        # W1, resident in VMEM
            pl.BlockSpec((1, hidden), lambda i: (0, 0)),          # b1, resident
            pl.BlockSpec((hidden, dim), lambda i: (0, 0)),        # W2, resident
            pl.BlockSpec((1, dim), lambda i: (0, 0)),             # b2, resident
        ]
        out_specs = pl.BlockSpec((tm_eff, dim), lambda i: (i, 0))
        scratch = []
        kernel = mlp_kernel_single
        dims_sem = ("parallel",)

    # ---- VMEM limit (capped below the real device capacity) ---------------------------
    est = _vmem_estimate(tm_eff, th_eff, dim, hidden, x_dt, w_dt, tiled=tiled)
    vmem_limit = int(min(max(est + (8 << 20), 32 << 20),
                         max(vmem_cap - (4 << 20), 32 << 20)))

    # ---- advisory cost estimate for the XLA scheduler ----------------------------------
    xb = jnp.dtype(x_dt).itemsize
    wb = jnp.dtype(w_dt).itemsize
    cost = pl.CostEstimate(
        flops=int(4 * n_pad * dim * hidden),
        transcendentals=int(n_pad * hidden),
        bytes_accessed=int(2 * n_pad * dim * xb + (2 * dim * hidden + hidden + dim) * wb),
    )

    out = pl.pallas_call(
        kernel,
        out_shape=jax.ShapeDtypeStruct((n_pad, dim), x.dtype),
        grid_spec=pltpu.PrefetchScalarGridSpec(
            num_scalar_prefetch=0,
            grid=grid,
            in_specs=in_specs,
            out_specs=out_specs,
            scratch_shapes=scratch,
        ),
        compiler_params=pltpu.CompilerParams(
            dimension_semantics=dims_sem,
            vmem_limit_bytes=vmem_limit,
        ),
        cost_estimate=cost,
    )(x, w1, b1_2d, w2, b2_2d)

    return out[:N]


# --------------------------------------------------------------------------------------
# Reference & parameter helpers
# --------------------------------------------------------------------------------------
def mlp_ref(x, w1, b1, w2, b2):
    xf = x.astype(jnp.float32)
    h = jnp.dot(xf, w1.astype(jnp.float32),
                precision=jax.lax.Precision.HIGHEST) + b1.astype(jnp.float32)
    h = _gelu_tanh(h)
    y = jnp.dot(h, w2.astype(jnp.float32),
                precision=jax.lax.Precision.HIGHEST) + b2.astype(jnp.float32)
    return y.astype(x.dtype)


def _make_params(key, dim, hidden, dtype=jnp.float32):
    kw1, kb1, kw2, kb2 = jax.random.split(key, 4)
    # nn.Linear default init: uniform +/- 1/sqrt(fan_in). Stored transposed as (in, out).
    lim1 = 1.0 / math.sqrt(dim)
    w1 = jax.random.uniform(kw1, (dim, hidden), minval=-lim1, maxval=lim1).astype(dtype)
    b1 = jax.random.uniform(kb1, (hidden,), minval=-lim1, maxval=lim1).astype(dtype)
    lim2 = 1.0 / math.sqrt(hidden)
    w2 = jax.random.uniform(kw2, (hidden, dim), minval=-lim2, maxval=lim2).astype(dtype)
    b2 = jax.random.uniform(kb2, (dim,), minval=-lim2, maxval=lim2).astype(dtype)
    return w1, b1, w2, b2


if __name__ == "__main__":
    key = jax.random.PRNGKey(0)

    # --- Test 1: small toy shapes consistent with the module (batch, seq, dim) tokens.
    #     Exercises the resident-weights (single hidden step) path.
    batch, seq, dim, hidden = 2, 8, 32, 64
    kx, kp = jax.random.split(key)
    x = jax.random.normal(kx, (batch, seq, dim), dtype=jnp.float32)
    w1, b1, w2, b2 = _make_params(kp, dim, hidden)

    x_flat = x.reshape(batch * seq, dim)
    out = mlp_forward(x_flat, w1, b1, w2, b2).reshape(batch, seq, dim)
    jax.block_until_ready(out)

    ref = mlp_ref(x_flat, w1, b1, w2, b2).reshape(batch, seq, dim)
    assert jnp.allclose(out, ref, atol=1e-4, rtol=1e-4), "mismatch vs reference (toy shapes)"

    # --- Test 2: force the hidden-tiled accumulator path (grid k > 1) ------------------
    N2, dim2, hidden2 = 256, 128, 256
    kx2, kp2 = jax.random.split(jax.random.PRNGKey(1))
    x2 = jax.random.normal(kx2, (N2, dim2), dtype=jnp.float32)
    w1b, b1b, w2b, b2b = _make_params(kp2, dim2, hidden2)

    out2 = mlp_forward(x2, w1b, b1b, w2b, b2b, th=128)
    jax.block_until_ready(out2)
    ref2 = mlp_ref(x2, w1b, b1b, w2b, b2b)
    assert jnp.allclose(out2, ref2, atol=1e-4, rtol=1e-4), "mismatch vs reference (tiled path)"

    # --- Test 3: bf16 mixed-precision path (native-dtype MXU feeds, f32 accumulation) --
    N3, dim3, hidden3 = 64, 128, 256
    kx3, kp3 = jax.random.split(jax.random.PRNGKey(2))
    x3 = jax.random.normal(kx3, (N3, dim3), dtype=jnp.float32).astype(jnp.bfloat16)
    w1c, b1c, w2c, b2c = _make_params(kp3, dim3, hidden3, dtype=jnp.bfloat16)

    out3 = mlp_forward(x3, w1c, b1c, w2c, b2c)
    jax.block_until_ready(out3)
    ref3 = mlp_ref(x3, w1c, b1c, w2c, b2c)
    assert jnp.allclose(out3.astype(jnp.float32), ref3.astype(jnp.float32),
                        atol=5e-2, rtol=5e-2), "mismatch vs reference (bf16 path)"

    print("KERNEL_OK")
</pallas_src>

<mosaic_0001>
module attributes {stable_mosaic.version = 11 : i64} {
  func.func @mlp_kernel_single(%arg0: i32, %arg1: memref<8x32xf32, #tpu.memory_space<vmem>>, %arg2: memref<32x64xf32, #tpu.memory_space<vmem>>, %arg3: memref<1x64xf32, #tpu.memory_space<vmem>>, %arg4: memref<64x32xf32, #tpu.memory_space<vmem>>, %arg5: memref<1x32xf32, #tpu.memory_space<vmem>>, %arg6: memref<8x32xf32, #tpu.memory_space<vmem>>) attributes {dimension_semantics = [#tpu.dimension_semantics<parallel>], iteration_bounds = array<i64: 2>, scalar_prefetch = 0 : i64, scratch_operands = 0 : i64, tpu.core_type = #tpu.core_type<tc>, window_params = [{transform_indices = @transform_0, window_bounds = array<i64: 8, 32>}, {pipeline_mode = #tpu.pipeline_mode<synchronous>, transform_indices = @transform_1, window_bounds = array<i64: 32, 64>}, {pipeline_mode = #tpu.pipeline_mode<synchronous>, transform_indices = @transform_2, window_bounds = array<i64: 1, 64>}, {pipeline_mode = #tpu.pipeline_mode<synchronous>, transform_indices = @transform_3, window_bounds = array<i64: 64, 32>}, {pipeline_mode = #tpu.pipeline_mode<synchronous>, transform_indices = @transform_4, window_bounds = array<i64: 1, 32>}, {transform_indices = @transform_5, window_bounds = array<i64: 8, 32>}]} {
    %c0 = arith.constant 0 : index
    %c0_0 = arith.constant 0 : index
    %0 = vector.load %arg1[%c0, %c0_0] : memref<8x32xf32, #tpu.memory_space<vmem>>, vector<8x32xf32>
    %c0_1 = arith.constant 0 : index
    %c0_2 = arith.constant 0 : index
    %1 = vector.load %arg2[%c0_1, %c0_2] : memref<32x64xf32, #tpu.memory_space<vmem>>, vector<32x64xf32>
    %cst = arith.constant dense<0.000000e+00> : vector<8x64xf32>
    %2 = tpu.matmul %0, %1, %cst {dimension_numbers = #tpu.dot_dimension_numbers<[1], [0], [0], [1], [0, 0, 1, 1], [], []>} : vector<8x32xf32>, vector<32x64xf32>, vector<8x64xf32> -> vector<8x64xf32>
    %c0_3 = arith.constant 0 : index
    %c0_4 = arith.constant 0 : index
    %3 = vector.load %arg3[%c0_3, %c0_4] : memref<1x64xf32, #tpu.memory_space<vmem>>, vector<1x64xf32>
    %4 = vector.broadcast %3 : vector<1x64xf32> to vector<8x64xf32>
    %5 = arith.addf %2, %4 : vector<8x64xf32>
    %cst_5 = arith.constant 5.000000e-01 : f32
    %6 = vector.broadcast %cst_5 : f32 to vector<8x64xf32>
    %7 = arith.mulf %6, %5 : vector<8x64xf32>
    %cst_6 = arith.constant 4.471500e-02 : f32
    %8 = vector.broadcast %cst_6 : f32 to vector<8x64xf32>
    %9 = arith.mulf %8, %5 : vector<8x64xf32>
    %10 = arith.mulf %9, %5 : vector<8x64xf32>
    %11 = arith.mulf %10, %5 : vector<8x64xf32>
    %12 = arith.addf %5, %11 : vector<8x64xf32>
    %cst_7 = arith.constant 0.797884583 : f32
    %13 = vector.broadcast %cst_7 : f32 to vector<8x64xf32>
    %14 = arith.mulf %13, %12 : vector<8x64xf32>
    %15 = math.tanh %14 : vector<8x64xf32>
    %cst_8 = arith.constant 1.000000e+00 : f32
    %16 = vector.broadcast %cst_8 : f32 to vector<8x64xf32>
    %17 = arith.addf %16, %15 : vector<8x64xf32>
    %18 = arith.mulf %7, %17 : vector<8x64xf32>
    %c0_9 = arith.constant 0 : index
    %c0_10 = arith.constant 0 : index
    %19 = vector.load %arg4[%c0_9, %c0_10] : memref<64x32xf32, #tpu.memory_space<vmem>>, vector<64x32xf32>
    %cst_11 = arith.constant dense<0.000000e+00> : vector<8x32xf32>
    %20 = tpu.matmul %18, %19, %cst_11 {dimension_numbers = #tpu.dot_dimension_numbers<[1], [0], [0], [1], [0, 0, 1, 1], [], []>} : vector<8x64xf32>, vector<64x32xf32>, vector<8x32xf32> -> vector<8x32xf32>
    %c0_12 = arith.constant 0 : index
    %c0_13 = arith.constant 0 : index
    %21 = vector.load %arg5[%c0_12, %c0_13] : memref<1x32xf32, #tpu.memory_space<vmem>>, vector<1x32xf32>
    %22 = vector.broadcast %21 : vector<1x32xf32> to vector<8x32xf32>
    %23 = arith.addf %20, %22 : vector<8x32xf32>
    %c0_14 = arith.constant 0 : index
    %c0_15 = arith.constant 0 : index
    %24 = vector.load %arg6[%c0_14, %c0_15] : memref<8x32xf32, #tpu.memory_space<vmem>>, vector<8x32xf32>
    tpu.vector_store %arg6[%c0_14, %c0_15], %23 {strides = array<i32>} : memref<8x32xf32, #tpu.memory_space<vmem>>, vector<8x32xf32>,
    return
  }
  func.func @transform_0(%arg0: i32) -> (i32, i32) {
    %c0_i32 = arith.constant 0 : i32
    %c0_i32_0 = arith.constant 0 : i32
    return %arg0, %c0_i32 : i32, i32
  }
  func.func @transform_1(%arg0: i32) -> (i32, i32) {
    %c0_i32 = arith.constant 0 : i32
    %c0_i32_0 = arith.constant 0 : i32
    %c0_i32_1 = arith.constant 0 : i32
    return %c0_i32, %c0_i32_0 : i32, i32
  }
  func.func @transform_2(%arg0: i32) -> (i32, i32) {
    %c0_i32 = arith.constant 0 : i32
    %c0_i32_0 = arith.constant 0 : i32
    %c0_i32_1 = arith.constant 0 : i32
    return %c0_i32, %c0_i32_0 : i32, i32
  }
  func.func @transform_3(%arg0: i32) -> (i32, i32) {
    %c0_i32 = arith.constant 0 : i32
    %c0_i32_0 = arith.constant 0 : i32
    %c0_i32_1 = arith.constant 0 : i32
    return %c0_i32, %c0_i32_0 : i32, i32
  }
  func.func @transform_4(%arg0: i32) -> (i32, i32) {
    %c0_i32 = arith.constant 0 : i32
    %c0_i32_0 = arith.constant 0 : i32
    %c0_i32_1 = arith.constant 0 : i32
    return %c0_i32, %c0_i32_0 : i32, i32
  }
  func.func @transform_5(%arg0: i32) -> (i32, i32) {
    %c0_i32 = arith.constant 0 : i32
    %c0_i32_0 = arith.constant 0 : i32
    return %arg0, %c0_i32 : i32, i32
  }
}

</mosaic_0001>

<llo_original>
// kernel: tpu_custom_call.1
$region0: #{tpu_custom_call.1}
  #allocation0 [shape = 'u32[]', space=smem, size = 0x4, offset = 0x4, fixed_abs, tag = 'smem constant byte address 0x4 - core index']
  #allocation1 [shape = 'u32[144,128]{1,0:T(1,128)}', space=vmem, size = 0x12000, scoped, tag = 'internal scratch']
  %s0 = inlined_call_operand.vmem [shape: f32[16,32], index: 0, kind: input, shape index: {}]
  %s1 = inlined_call_operand.vmem [shape: f32[32,64], index: 1, kind: input, shape index: {}]
  %s2 = inlined_call_operand.vmem [shape: f32[1,64], index: 2, kind: input, shape index: {}]
  %s3 = inlined_call_operand.vmem [shape: f32[64,32], index: 3, kind: input, shape index: {}]
  %s4 = inlined_call_operand.vmem [shape: f32[1,32], index: 4, kind: input, shape index: {}]
  %s5 = inlined_call_operand.hbm [shape: f32[16,32], index: 5, kind: output, shape index: {}]
  %s6 = sld [smem:[#allocation0]]
  $region53: #{tpu_custom_call.1} parent=0
    _
  %s8 = ssub.s32 1, %s6
  %s9 = scalar_select 0, %s8, %s6
  $region1: #{tpu_custom_call.1} parent=0
    #allocation2 [shape = 'u8[8192]{0}', space=vmem, size = 0x2000, scoped, tag = 'output window, operand 0']
    #allocation3 [shape = 's32[2]{0}', space=sflag, size = 0x8, scoped, tag = 'scoped memory for tpu_custom_call.1']
    %10 = vsyncpa [#allocation3], 0
    %s11 = scalar_lea.sflag [#allocation3], 1
    %12 = vsyncpa %s11, 0
    loop: start=0, step=1, limit=4
    $region2: #{tpu_custom_call.1} parent=1 // loop_pre_header
      _
    $region3: #{tpu_custom_call.1} parent=1 // loop_header
      %s14 = sphi 0, %s18
      %p15 = scmp.ge.s32.totalorder %s14, 4
      %s24 = sphi 0, %s26
      %s27 = sphi 0, %s24
      %s28 = sphi 0, %s27
      %s44 = sphi 0, %s28
      %s48 = sphi 0, %s48
      %s50 = sphi 0, %s48
      %s51 = sphi 0, %s50
      %s65 = sphi 0, %s51
      %s69 = sphi 0, %s69
      %s71 = sphi 0, %s69
      %s72 = sphi 0, %s71
      %s86 = sphi 0, %s72
      %s90 = sphi 0, %s90
      %s92 = sphi 0, %s90
      %s93 = sphi 0, %s92
      %s107 = sphi 0, %s93
      %s111 = sphi 0, %s111
      %s113 = sphi 0, %s111
      %s114 = sphi 0, %s113
      %s128 = sphi 0, %s114
      %s134 = sphi 0, %s136
      %s137 = sphi 0, %s134
      %s138 = sphi 0, %s137
      %s154 = sphi 0, %s138
    $region4: #{tpu_custom_call.1} parent=1 // loop_header_branch
      %17 = sbr.rel (%p15) target = $region8
    $region5: #{tpu_custom_call.1} parent=1 // loop_body
      %s19 = ssub.s32 %s14, 1
      %s20 = ssub.s32 %s14, 2
      %s21 = sadd.s32 %s14, 1
      %s22 = ssub.s32 %s14, %s21
      %p23 = scmp.eq.s32.totalorder %s22, 0
      %s25 = sadd.s32 %s24, 1
      %s26 = scalar_select %p23, %s24, %s25
      %p29 = pneg %p23
      %p30 = scmp.eq.s32.totalorder %s14, 1
      %p31 = por %p29, %p30
      %p32 = scmp.ne.s32.totalorder %s24, %s27
      %p33 = scmp.eq.s32.totalorder %s14, 0
      %p34 = por %p32, %p33
      %p35 = scmp.ne.s32.totalorder %s24, %s27
      %p36 = scmp.eq.s32.totalorder %s19, 1
      %p37 = por %p35, %p36
      %p38 = scmp.ne.s32.totalorder %s27, %s28
      %p39 = scmp.eq.s32.totalorder %s19, 0
      %p40 = por %p38, %p39
      %p41 = scmp.ne.s32.totalorder %s27, %s28
      %p42 = scmp.eq.s32.totalorder %s20, 1
      %p43 = por %p41, %p42
      %p45 = scmp.ne.s32.totalorder %s28, %s44
      %p46 = scmp.eq.s32.totalorder %s20, 0
      %p47 = por %p45, %p46
      %s49 = sadd.s32 %s48, 1
      %p52 = scmp.eq.s32.totalorder %s14, 1
      %p53 = scmp.ne.s32.totalorder %s48, %s50
      %p54 = scmp.eq.s32.totalorder %s14, 0
      %p55 = por %p53, %p54
      %p56 = scmp.ne.s32.totalorder %s48, %s50
      %p57 = scmp.eq.s32.totalorder %s19, 1
      %p58 = por %p56, %p57
      %p59 = scmp.ne.s32.totalorder %s50, %s51
      %p60 = scmp.eq.s32.totalorder %s19, 0
      %p61 = por %p59, %p60
      %p62 = scmp.ne.s32.totalorder %s50, %s51
      %p63 = scmp.eq.s32.totalorder %s20, 1
      %p64 = por %p62, %p63
      %p66 = scmp.ne.s32.totalorder %s51, %s65
      %p67 = scmp.eq.s32.totalorder %s20, 0
      %p68 = por %p66, %p67
      %s70 = sadd.s32 %s69, 1
      %p73 = scmp.eq.s32.totalorder %s14, 1
      %p74 = scmp.ne.s32.totalorder %s69, %s71
      %p75 = scmp.eq.s32.totalorder %s14, 0
      %p76 = por %p74, %p75
      %p77 = scmp.ne.s32.totalorder %s69, %s71
      %p78 = scmp.eq.s32.totalorder %s19, 1
      %p79 = por %p77, %p78
      %p80 = scmp.ne.s32.totalorder %s71, %s72
      %p81 = scmp.eq.s32.totalorder %s19, 0
      %p82 = por %p80, %p81
      %p83 = scmp.ne.s32.totalorder %s71, %s72
      %p84 = scmp.eq.s32.totalorder %s20, 1
      %p85 = por %p83, %p84
      %p87 = scmp.ne.s32.totalorder %s72, %s86
      %p88 = scmp.eq.s32.totalorder %s20, 0
      %p89 = por %p87, %p88
      %s91 = sadd.s32 %s90, 1
      %p94 = scmp.eq.s32.totalorder %s14, 1
      %p95 = scmp.ne.s32.totalorder %s90, %s92
      %p96 = scmp.eq.s32.totalorder %s14, 0
      %p97 = por %p95, %p96
      %p98 = scmp.ne.s32.totalorder %s90, %s92
      %p99 = scmp.eq.s32.totalorder %s19, 1
      %p100 = por %p98, %p99
      %p101 = scmp.ne.s32.totalorder %s92, %s93
      %p102 = scmp.eq.s32.totalorder %s19, 0
      %p103 = por %p101, %p102
      %p104 = scmp.ne.s32.totalorder %s92, %s93
      %p105 = scmp.eq.s32.totalorder %s20, 1
      %p106 = por %p104, %p105
      %p108 = scmp.ne.s32.totalorder %s93, %s107
      %p109 = scmp.eq.s32.totalorder %s20, 0
      %p110 = por %p108, %p109
      %s112 = sadd.s32 %s111, 1
      %p115 = scmp.eq.s32.totalorder %s14, 1
      %p116 = scmp.ne.s32.totalorder %s111, %s113
      %p117 = scmp.eq.s32.totalorder %s14, 0
      %p118 = por %p116, %p117
      %p119 = scmp.ne.s32.totalorder %s111, %s113
      %p120 = scmp.eq.s32.totalorder %s19, 1
      %p121 = por %p119, %p120
      %p122 = scmp.ne.s32.totalorder %s113, %s114
      %p123 = scmp.eq.s32.totalorder %s19, 0
      %p124 = por %p122, %p123
      %p125 = scmp.ne.s32.totalorder %s113, %s114
      %p126 = scmp.eq.s32.totalorder %s20, 1
      %p127 = por %p125, %p126
      %p129 = scmp.ne.s32.totalorder %s114, %s128
      %p130 = scmp.eq.s32.totalorder %s20, 0
      %p131 = por %p129, %p130
      %s132 = ssub.s32 %s14, %s21
      %p133 = scmp.eq.s32.totalorder %s132, 0
      %s135 = sadd.s32 %s134, 1
      %s136 = scalar_select %p133, %s134, %s135
      %p139 = pneg %p133
      %p140 = scmp.eq.s32.totalorder %s14, 1
      %p141 = por %p139, %p140
      %p142 = scmp.ne.s32.totalorder %s134, %s137
      %p143 = scmp.eq.s32.totalorder %s14, 0
      %p144 = por %p142, %p143
      %p145 = scmp.ne.s32.totalorder %s134, %s137
      %p146 = scmp.eq.s32.totalorder %s19, 1
      %p147 = por %p145, %p146
      %p148 = scmp.ne.s32.totalorder %s137, %s138
      %p149 = scmp.eq.s32.totalorder %s19, 0
      %p150 = por %p148, %p149
      %p151 = scmp.ne.s32.totalorder %s137, %s138
      %p152 = scmp.eq.s32.totalorder %s20, 1
      %p153 = por %p151, %p152
      %p155 = scmp.ne.s32.totalorder %s138, %s154
      %p156 = scmp.eq.s32.totalorder %s20, 0
      %p157 = por %p155, %p156
      %p158 = scmp.le.s32.totalorder 1, %s14
      %p159 = scmp.lt.s32.totalorder %s14, 3
      %p160 = pnand %p158, %p159
      %p161 = pneg %p160
      // Predicated region
      $region9: #{tpu_custom_call.1} parent=5 // pred_check
        _
      $region10: #{tpu_custom_call.1} parent=5 // pred_check_branch
        %163 = sbr.rel (%p160) target = $region12
      $region11: #{tpu_custom_call.1} parent=5 // pred_region
        %s164 = ssub.s32 %s14, 1
        // Predicated region
        $region13: #{tpu_custom_call.1} parent=11 // pred_check
          %p165 = pneg %p61
        $region14: #{tpu_custom_call.1} parent=11 // pred_check_branch
          %167 = sbr.rel (%p165) target = $region16
        $region15: #{tpu_custom_call.1} parent=11 // pred_region
          _
        $region16: #{tpu_custom_call.1} parent=11 // pred_fallthru
          _
        // Predicated region
        $region17: #{tpu_custom_call.1} parent=11 // pred_check
          %p168 = pneg %p82
        $region18: #{tpu_custom_call.1} parent=11 // pred_check_branch
          %170 = sbr.rel (%p168) target = $region20
        $region19: #{tpu_custom_call.1} parent=11 // pred_region
          _
        $region20: #{tpu_custom_call.1} parent=11 // pred_fallthru
          _
        // Predicated region
        $region21: #{tpu_custom_call.1} parent=11 // pred_check
          %p171 = pneg %p103
        $region22: #{tpu_custom_call.1} parent=11 // pred_check_branch
          %173 = sbr.rel (%p171) target = $region24
        $region23: #{tpu_custom_call.1} parent=11 // pred_region
          _
        $region24: #{tpu_custom_call.1} parent=11 // pred_fallthru
          _
        // Predicated region
        $region25: #{tpu_custom_call.1} parent=11 // pred_check
          %p174 = pneg %p124
        $region26: #{tpu_custom_call.1} parent=11 // pred_check_branch
          %176 = sbr.rel (%p174) target = $region28
        $region27: #{tpu_custom_call.1} parent=11 // pred_region
          _
        $region28: #{tpu_custom_call.1} parent=11 // pred_fallthru
          _
      $region12: #{tpu_custom_call.1} parent=5 // pred_fallthru
        _
      %p177 = scmp.lt.s32.totalorder %s14, 2
      // Predicated region
      $region29: #{tpu_custom_call.1} parent=5 // pred_check
        %p178 = pneg %p177
      $region30: #{tpu_custom_call.1} parent=5 // pred_check_branch
        %180 = sbr.rel (%p178) target = $region32
      $region31: #{tpu_custom_call.1} parent=5 // pred_region
        // Predicated region
        $region33: #{tpu_custom_call.1} parent=31 // pred_check
          %p181 = pneg %p34
        $region34: #{tpu_custom_call.1} parent=31 // pred_check_branch
          %183 = sbr.rel (%p181) target = $region36
        $region35: #{tpu_custom_call.1} parent=31 // pred_region
          %p184 = scmp.lt.s32.totalorder %s14, 1
          %s185 = scalar_select %p184, %s14, 1
          %s186 = smul.addr %s185, 8
          %s187 = scalar_lea.vmem %s0, %s186
        $region36: #{tpu_custom_call.1} parent=31 // pred_fallthru
          _
      $region32: #{tpu_custom_call.1} parent=5 // pred_fallthru
        _
      %p188 = scmp.le.s32.totalorder 1, %s14
      %p189 = scmp.lt.s32.totalorder %s14, 3
      %p190 = pnand %p188, %p189
      %p191 = pneg %p190
      // Predicated region
      $region37: #{tpu_custom_call.1} parent=5 // pred_check
        _
      $region38: #{tpu_custom_call.1} parent=5 // pred_check_branch
        %193 = sbr.rel (%p190) target = $region40
      $region39: #{tpu_custom_call.1} parent=5 // pred_region
        %s194 = ssub.s32 %s14, 1
        %p195 = scmp.lt.s32.totalorder %s19, 1
        %s196 = scalar_select %p195, %s19, 1
        %s197 = smul.addr %s196, 8
        %s198 = scalar_lea.vmem %s0, %s197
        %p199 = pneg %p40
        %p200 = pneg %p37
        %p201 = pneg %p61
        %p202 = pneg %p58
        %p203 = pneg %p82
        %p204 = pneg %p79
        %p205 = pneg %p103
        %p206 = pneg %p100
        %p207 = pneg %p124
        %p208 = pneg %p121
        %p209 = pneg %p150
        %p210 = pneg %p147
        %s211 = sand.u32 %s137, 1
        %s212 = scalar_lea.sflag [#allocation3], %s211
        %s213 = sand.u32 %s137, 1
        %s214 = smul.addr %s213, 8
        %s215 = scalar_lea.vmem [#allocation2], %s214
        %p216 = scmp.lt.s32.totalorder %s19, 1
        %s217 = scalar_select %p216, %s19, 1
        %s218 = smul.addr %s217, 8
        %s219 = scalar_lea.vmem %s0, %s218
        %v220 = vld [vmem:[%s219] sm:$0xff]
        %v221 = vld [vmem:[%s1] sm:$0xff]
        %v222 = vld [vmem:[%s1 + $0x8] sm:$0xff]
        %v223 = vld [vmem:[%s1 + $0x10] sm:$0xff]
        %v224 = vld [vmem:[%s1 + $0x18] sm:$0xff]
        %v225 = vld [vmem:[%s2] sm:$0x1]
        %v227 = vlaneseq
        %v228 = vshrl.u32 %v227, 7
        %v229 = vsub.s32 0, %v228
        %v230 = vrot.slane %v225, %v229
        %vm232 = vcmask 261120
        %v234 = vsel %vm232, %v220, 0
        %236 = vmatprep.subr.mxu0 0.0
        %237 = vmatpush1.msra.mxu0 %v221
        %238 = vmatprep.subr.mxu0 0.0
        %239 = vmatpush1.msra.mxu0 %v222
        %240 = vmatprep.subr.mxu0 0.0
        %241 = vmatpush1.msra.mxu0 %v223
        %242 = vmatprep.subr.mxu0 0.0
        %243 = vmatpush1.msra.mxu0 %v224
        %244 = vmatprep.subr.mxu0 0.0
        %245 = vmatpush1.msra.mxu0 0.0
        %246 = vmatprep.subr.mxu0 0.0
        %247 = vmatpush1.msra.mxu0 0.0
        %248 = vmatprep.subr.mxu0 0.0
        %249 = vmatpush1.msra.mxu0 0.0
        %250 = vmatprep.subr.mxu0 0.0
        %251 = vmatpush1.msra.mxu0 0.0
        %252 = vmatprep.subr.mxu0 0.0
        %253 = vmatpush1.msra.mxu0 0.0
        %254 = vmatprep.subr.mxu0 0.0
        %255 = vmatpush1.msra.mxu0 0.0
        %256 = vmatprep.subr.mxu0 0.0
        %257 = vmatpush1.msra.mxu0 0.0
        %258 = vmatprep.subr.mxu0 0.0
        %259 = vmatpush1.msra.mxu0 0.0
        %260 = vmatprep.subr.mxu0 0.0
        %261 = vmatpush1.msra.mxu0 0.0
        %262 = vmatprep.subr.mxu0 0.0
        %263 = vmatpush1.msra.mxu0 0.0
        %264 = vmatprep.subr.mxu0 0.0
        %265 = vmatpush1.msra.mxu0 0.0
        %266 = vmatprep.subr.mxu0 0.0
        %267 = vmatpush1.msra.mxu0 0.0
        %268 = vmatprep.subr.mxu0 0.0
        %269 = vmatpush1.msra.mxu0 0.0
        %270 = vmatprep.subr.mxu0 0.0
        %271 = vmatpush1.msra.mxu0 0.0
        %272 = vmatprep.subr.mxu0 0.0
        %273 = vmatpush1.msra.mxu0 0.0
        %274 = vmatprep.subr.mxu0 0.0
        %275 = vmatpush1.msra.mxu0 0.0
        %276 = vmatprep.subr.mxu0 0.0
        %277 = vmatpush1.msra.mxu0 0.0
        %278 = vmatprep.subr.mxu0 0.0
        %279 = vmatpush1.msra.mxu0 0.0
        %280 = vmatprep.subr.mxu0 0.0
        %281 = vmatpush1.msra.mxu0 0.0
        %282 = vmatprep.subr.mxu0 0.0
        %283 = vmatpush1.msra.mxu0 0.0
        %284 = vmatprep.subr.mxu0 0.0
        %285 = vmatpush1.msra.mxu0 0.0
        %286 = vmatprep.subr.mxu0 0.0
        %287 = vmatpush1.msra.mxu0 0.0
        %288 = vmatprep.subr.mxu0 0.0
        %289 = vmatpush1.msra.mxu0 0.0
        %290 = vmatprep.subr.mxu0 0.0
        %291 = vmatpush1.msra.mxu0 0.0
        %292 = vmatprep.subr.mxu0 0.0
        %293 = vmatpush1.msra.mxu0 0.0
        %294 = vmatprep.subr.mxu0 0.0
        %295 = vmatpush1.msra.mxu0 0.0
        %296 = vmatprep.subr.mxu0 0.0
        %297 = vmatpush1.msra.mxu0 0.0
        %298 = vmatprep.subr.mxu0 0.0
        %299 = vmatpush1.msra.mxu0 0.0
        %300 = vmatprep.mubr.f32.mxu0 0.0
        %301 = vmatmul.mubr.f32.gmra.mrb[0].mxu0 %v234
        %v302 = vpop.f32.mrb[0].mxu0
        %v303 = vadd.f32 %v230, %v302
        %v304 = vpop.f32.mrb[0].mxu0
        %305 = vdwg.mxu0
        %v306 = vmul.f32 %v303, 0.5
        %v307 = vmul.f32 %v303, 0.044715
        %v308 = vmul.f32 %v307, %v303
        %v309 = vmul.f32 %v308, %v303
        %v310 = vadd.f32 %v303, %v309
        %v311 = vmul.f32 %v310, 0.7978846
        %v312 = vtanh.pop %v311
        %v313 = vadd.f32 %v312, 1.0
        %v314 = vmul.f32 %v306, %v313
        %v315 = vld [vmem:[%s3] sm:$0xff]
        %v316 = vld [vmem:[%s3 + $0x8] sm:$0xff]
        %v317 = vld [vmem:[%s3 + $0x10] sm:$0xff]
        %v318 = vld [vmem:[%s3 + $0x18] sm:$0xff]
        %v319 = vld [vmem:[%s3 + $0x20] sm:$0xff]
        %v320 = vld [vmem:[%s3 + $0x28] sm:$0xff]
        %v321 = vld [vmem:[%s3 + $0x30] sm:$0xff]
        %v322 = vld [vmem:[%s3 + $0x38] sm:$0xff]
        %v323 = vld [vmem:[%s4] sm:$0x1]
        %v325 = vlaneseq
        %v326 = vshrl.u32 %v325, 7
        %v327 = vsub.s32 0, %v326
        %v328 = vrot.slane %v323, %v327
        %vm330 = vcmask 523264
        %v332 = vsel %vm330, %v314, 0
        %334 = vmatprep.subr.mxu0 0.0
        %335 = vmatpush1.msra.mxu0 %v315
        %336 = vmatprep.subr.mxu0 0.0
        %337 = vmatpush1.msra.mxu0 %v316
        %338 = vmatprep.subr.mxu0 0.0
        %339 = vmatpush1.msra.mxu0 %v317
        %340 = vmatprep.subr.mxu0 0.0
        %341 = vmatpush1.msra.mxu0 %v318
        %342 = vmatprep.subr.mxu0 0.0
        %343 = vmatpush1.msra.mxu0 %v319
        %344 = vmatprep.subr.mxu0 0.0
        %345 = vmatpush1.msra.mxu0 %v320
        %346 = vmatprep.subr.mxu0 0.0
        %347 = vmatpush1.msra.mxu0 %v321
        %348 = vmatprep.subr.mxu0 0.0
        %349 = vmatpush1.msra.mxu0 %v322
        %350 = vmatprep.subr.mxu0 0.0
        %351 = vmatpush1.msra.mxu0 0.0
        %352 = vmatprep.subr.mxu0 0.0
        %353 = vmatpush1.msra.mxu0 0.0
        %354 = vmatprep.subr.mxu0 0.0
        %355 = vmatpush1.msra.mxu0 0.0
        %356 = vmatprep.subr.mxu0 0.0
        %357 = vmatpush1.msra.mxu0 0.0
        %358 = vmatprep.subr.mxu0 0.0
        %359 = vmatpush1.msra.mxu0 0.0
        %360 = vmatprep.subr.mxu0 0.0
        %361 = vmatpush1.msra.mxu0 0.0
        %362 = vmatprep.subr.mxu0 0.0
        %363 = vmatpush1.msra.mxu0 0.0
        %364 = vmatprep.subr.mxu0 0.0
        %365 = vmatpush1.msra.mxu0 0.0
        %366 = vmatprep.subr.mxu0 0.0
        %367 = vmatpush1.msra.mxu0 0.0
        %368 = vmatprep.subr.mxu0 0.0
        %369 = vmatpush1.msra.mxu0 0.0
        %370 = vmatprep.subr.mxu0 0.0
        %371 = vmatpush1.msra.mxu0 0.0
        %372 = vmatprep.subr.mxu0 0.0
        %373 = vmatpush1.msra.mxu0 0.0
        %374 = vmatprep.subr.mxu0 0.0
        %375 = vmatpush1.msra.mxu0 0.0
        %376 = vmatprep.subr.mxu0 0.0
        %377 = vmatpush1.msra.mxu0 0.0
        %378 = vmatprep.subr.mxu0 0.0
        %379 = vmatpush1.msra.mxu0 0.0
        %380 = vmatprep.subr.mxu0 0.0
        %381 = vmatpush1.msra.mxu0 0.0
        %382 = vmatprep.subr.mxu0 0.0
        %383 = vmatpush1.msra.mxu0 0.0
        %384 = vmatprep.subr.mxu0 0.0
        %385 = vmatpush1.msra.mxu0 0.0
        %386 = vmatprep.subr.mxu0 0.0
        %387 = vmatpush1.msra.mxu0 0.0
        %388 = vmatprep.subr.mxu0 0.0
        %389 = vmatpush1.msra.mxu0 0.0
        %390 = vmatprep.subr.mxu0 0.0
        %391 = vmatpush1.msra.mxu0 0.0
        %392 = vmatprep.subr.mxu0 0.0
        %393 = vmatpush1.msra.mxu0 0.0
        %394 = vmatprep.subr.mxu0 0.0
        %395 = vmatpush1.msra.mxu0 0.0
        %396 = vmatprep.subr.mxu0 0.0
        %397 = vmatpush1.msra.mxu0 0.0
        %398 = vmatprep.mubr.f32.mxu0 0.0
        %399 = vmatmul.mubr.f32.gmra.mrb[0].mxu0 %v332
        %v400 = vpop.f32.mrb[0].mxu0
        %v401 = vadd.f32 %v328, %v400
        %v402 = vpop.f32.mrb[0].mxu0
        %403 = vdwg.mxu0
        %404 = vst.msk [vmem:[%s215] sm:$0xff] %vm232, %v401
        %s405 = sand.u32 %s137, 1
        %s406 = scalar_lea.sflag [#allocation3], %s405
        %s407 = sand.u32 %s137, 1
        %s408 = smul.addr %s407, 8
        %s409 = scalar_lea.vmem [#allocation2], %s408
        // Predicated region
        $region41: #{tpu_custom_call.1} parent=39 // pred_check
          %p410 = pneg %p147
        $region42: #{tpu_custom_call.1} parent=39 // pred_check_branch
          %412 = sbr.rel (%p410) target = $region44
        $region43: #{tpu_custom_call.1} parent=39 // pred_region
          %s414 = ssub.s32 128, 128
          %415 = vsyncadd %s406, %s414
          %s416 = smul.addr %s19, 128
          %s417 = scalar_lea.hbm %s5, %s416
          %s419 = sshll.u32 %s409, 4
          %s420 = int_to_ptr.vmem [resolvable:$true] %s419
          %422 = dma.vmem_to_hbm [thread:$0]  %s420, 128, %s417, %s406
        $region44: #{tpu_custom_call.1} parent=39 // pred_fallthru
          _
      $region40: #{tpu_custom_call.1} parent=5 // pred_fallthru
        _
      %p423 = scmp.le.s32.totalorder 2, %s14
      // Predicated region
      $region45: #{tpu_custom_call.1} parent=5 // pred_check
        %p424 = pneg %p423
      $region46: #{tpu_custom_call.1} parent=5 // pred_check_branch
        %426 = sbr.rel (%p424) target = $region48
      $region47: #{tpu_custom_call.1} parent=5 // pred_region
        %s427 = ssub.s32 %s14, 2
        // Predicated region
        $region49: #{tpu_custom_call.1} parent=47 // pred_check
          %p428 = pneg %p153
        $region50: #{tpu_custom_call.1} parent=47 // pred_check_branch
          %430 = sbr.rel (%p428) target = $region52
        $region51: #{tpu_custom_call.1} parent=47 // pred_region
          %s431 = sand.u32 %s138, 1
          %s432 = scalar_lea.sflag [#allocation3], %s431
          %s433 = sand.u32 %s138, 1
          %s434 = smul.addr %s433, 8
          %s435 = scalar_lea.vmem [#allocation2], %s434
          %436 = dma.done %s432, 128
        $region52: #{tpu_custom_call.1} parent=47 // pred_fallthru
          _
      $region48: #{tpu_custom_call.1} parent=5 // pred_fallthru
        _
    $region6: #{tpu_custom_call.1} parent=1 // loop_footer
      %s18 = sadd.s32 1, %s14
    $region7: #{tpu_custom_call.1} parent=1 // loop_footer_branch
      %13 = sbr.rel target = $region3
    $region8: #{tpu_custom_call.1} parent=1 // loop_exit
      _
    %437 = vsyncpa [#allocation3], 1
    %s438 = scalar_lea.sflag [#allocation3], 1
    %439 = vsyncpa %s438, 1

</llo_original>
